<compile_context>
chip_gen: v7x
topology: tpu7x:2x2x1
jax: 0.10.0
libtpu: 0.0.40
codegen_flags: <defaults>
</compile_context>

<pallas_src>
import math

import jax
import jax.numpy as jnp
from jax.experimental import pallas as pl
from jax.experimental.pallas import tpu as pltpu

FEAT_DIM = 512      # GaussianLayer input_dim (fixed by the module)
N_CLASSES = 10      # default num_classes

# Budget for the grid-varying rows input (2 pipeline buffers) -- keeps the
# double-buffered DMA well inside v5e's 16 MiB default scoped-VMEM limit and
# v7x's 32 MiB default / 64 MiB physical even at the real backbone's C_in~512.
_ROWS_VMEM_BUDGET = 8 << 20


def _round_up(n, m):
    return ((n + m - 1) // m) * m


def _fused_kernel(xs_ref, w_ref, b_ref, gw_ref, const_ref, o_ref):
    """Fused: stand-in backbone -> AvgPool2d(4) -> Gaussian log-likelihood.

    xs   : (TB, S, C_in)  bf16   batch-tile of (spatial x channel) rows
    w    : (C_in, 512)    bf16   stand-in pointwise-conv weight
    b    : (1, 512)       f32    stand-in bias
    gw   : (1024, C_pad)  f32    stacked [-0.5*inv_cov/S^2 ; centers*inv_cov/S]^T
    const: (1, C_pad)     f32    Z_log - 0.5 * sum(centers^2 * inv_covs)
    o    : (TB, C_pad)    f32    per-class log-likelihood (padded classes -> 0)
    """
    tb, s, c_in = xs_ref.shape
    feat = w_ref.shape[1]

    # TODO(synk): the real module wraps an arbitrary pretrained ResNet backbone
    # (net minus classifier); here a deterministic pointwise-conv+ReLU stand-in
    # (K = C_in is tiny -- do not tune tile sizes around this matmul).
    rows = xs_ref[...].reshape(tb * s, c_in)               # layout-free merge
    feats = jnp.dot(rows, w_ref[...],
                    preferred_element_type=jnp.float32)    # bf16 x bf16 -> f32
    feats = jnp.maximum(feats + b_ref[...], 0.0)           # (TB*S, 512)

    # AvgPool2d(4) over the 4x4 window == mean over S spatial positions.
    # The 1/S (and 1/S^2) scales are folded into gw, so a plain sum suffices.
    pooled = jnp.sum(feats.reshape(tb, s, feat), axis=1)   # (TB, 512) = S*mean

    # Diagonal-Gaussian log-likelihood as ONE f32 MXU matmul (quadratic form
    # expanded; kept in f32 per numerical-stability note):
    #   -0.5*(x-c)^T S^-1 (x-c) = x^2 @ (-0.5 S^-1) + x @ (c S^-1) - 0.5 c^T S^-1 c
    z = jnp.concatenate([pooled * pooled, pooled], axis=1)  # (TB, 1024)
    o_ref[...] = (jnp.dot(z, gw_ref[...], preferred_element_type=jnp.float32)
                  + const_ref[...])


def resnet_gaussian_forward(x, w, b, centers, covs, *, batch_tile=128):
    """Forward pass of Resnet_GaussianLayer.

    x: (B, C_in, H, W) float32, NCHW like PyTorch.
    w, b: stand-in backbone params (C_in, 512), (512,).
    centers, covs: GaussianLayer params (n_classes, 512).
    """
    B, C_in, H, W = x.shape
    n_classes, feat = centers.shape

    # --- stand-in backbone preprocessing (stride-4 subsample, channels-last) ---
    # TODO(synk): a real deployment would feed channels-last backbone
    # activations straight into the kernel; this transpose acts only on the
    # tiny subsampled (B,4,4,C_in) array.
    xs = x[:, :, ::4, ::4]                               # (B, C_in, 4, 4)
    xs = jnp.transpose(xs, (0, 2, 3, 1))                 # (B, 4, 4, C_in)
    S = xs.shape[1] * xs.shape[2]                        # 16 spatial positions
    xs = xs.reshape(B, S, C_in)

    # --- batch tile selection ---------------------------------------------
    # 1) multiple of 8 sublanes, default 128 to fill the MXU M dim, capped by B
    TB = min(_round_up(batch_tile, 8), _round_up(B, 8))
    # 2) explicit VMEM budget for the double-buffered bf16 rows block
    bytes_per_tb_row = 2 * S * C_in * 2                  # 2 buffers, bf16
    max_tb_vmem = max(8, (_ROWS_VMEM_BUDGET // bytes_per_tb_row) // 8 * 8)
    TB = min(TB, max_tb_vmem)
    # 3) keep >= 2 grid steps when there is enough work (v7x: 2 TensorCores
    #    are sharded over the "parallel" axis; a 1-step grid idles one TC)
    if B > 8 and TB > 8 and _round_up(B, TB) // TB < 2:
        TB = max(8, _round_up(TB // 2, 8))
    B_pad = _round_up(B, TB)
    if B_pad > B:
        xs = jnp.pad(xs, ((0, B_pad - B), (0, 0), (0, 0)))

    # bf16 backbone operands: bf16 MXU peak + half the rows HBM/DMA bytes.
    xs = xs.astype(jnp.bfloat16)
    w_bf = w.astype(jnp.bfloat16)
    b2 = b.astype(jnp.float32).reshape(1, feat)

    # --- parameter-derived Gaussian constants (computed once, outside kernel) ---
    eps = jnp.finfo(jnp.float32).eps
    inv_covs = 1.0 / (covs + eps)                                        # (C, 512)
    # NOTE: log(covs) without +eps matches the PyTorch GaussianLayer exactly.
    z_log = (-0.5 * jnp.sum(jnp.log(covs), axis=-1)
             - 0.5 * feat * math.log(2.0 * math.pi))                     # (C,)
    const = z_log - 0.5 * jnp.sum(centers * centers * inv_covs, axis=-1)  # (C,)
    quad_w = jnp.transpose(-0.5 * inv_covs) * (1.0 / (S * S))            # (512, C)
    lin_w = jnp.transpose(centers * inv_covs) * (1.0 / S)                # (512, C)
    gw = jnp.concatenate([quad_w, lin_w], axis=0)                        # (1024, C)

    # Pad class axis to a lane-dense 128-multiple (unmasked stores); padded
    # classes get zero coefficients and are sliced away below.
    C_pad = max(128, _round_up(n_classes, 128))
    gw = jnp.pad(gw, ((0, 0), (0, C_pad - n_classes)))
    const = jnp.pad(const, ((0, C_pad - n_classes),)).reshape(1, C_pad)

    grid = (B_pad // TB,)
    out_pad = pl.pallas_call(
        _fused_kernel,
        out_shape=jax.ShapeDtypeStruct((B_pad, C_pad), jnp.float32),
        grid_spec=pltpu.PrefetchScalarGridSpec(
            num_scalar_prefetch=0,
            grid=grid,
            in_specs=[
                pl.BlockSpec((TB, S, C_in), lambda i: (i, 0, 0)),   # rows (3-D)
                pl.BlockSpec((C_in, feat), lambda i: (0, 0)),       # w (bf16)
                pl.BlockSpec((1, feat), lambda i: (0, 0)),          # b
                pl.BlockSpec((2 * feat, C_pad), lambda i: (0, 0)),  # gauss weights
                pl.BlockSpec((1, C_pad), lambda i: (0, 0)),         # const
            ],
            out_specs=pl.BlockSpec((TB, C_pad), lambda i: (i, 0)),
        ),
        compiler_params=pltpu.CompilerParams(
            dimension_semantics=("parallel",)),
    )(xs, w_bf, b2, gw, const)

    return out_pad[:B, :n_classes]


def _reference_forward(x, w, b, centers, covs):
    """Pure-JAX f32 reference matching the PyTorch module (broadcast-diff form)."""
    B, C_in, H, W = x.shape
    xs = x[:, :, ::4, ::4]
    xs = jnp.transpose(xs, (0, 2, 3, 1))
    S = xs.shape[1] * xs.shape[2]
    rows = xs.reshape(B * S, C_in)
    feats = jnp.maximum(rows @ w + b[None, :], 0.0)
    pooled = jnp.mean(feats.reshape(B, S, -1), axis=1)
    eps = jnp.finfo(jnp.float32).eps
    z_log = (-0.5 * jnp.sum(jnp.log(covs), axis=-1)
             - 0.5 * covs.shape[1] * math.log(2.0 * math.pi))
    diff = pooled[:, None, :] - centers[None, :, :]
    exp_log = -0.5 * jnp.sum(diff * (1.0 / (covs + eps))[None, :, :] * diff, axis=-1)
    return z_log[None, :] + exp_log


if __name__ == "__main__":
    key = jax.random.PRNGKey(0)
    k_x, k_w, k_b, k_c, k_v = jax.random.split(key, 5)

    B, C_IN, H, W = 2, 4, 16, 16
    x = jax.random.normal(k_x, (B, C_IN, H, W), dtype=jnp.float32)

    # Deterministic synthetic parameters (shapes from the module's __init__):
    w = 0.1 * jax.random.normal(k_w, (C_IN, FEAT_DIM), dtype=jnp.float32)
    b = 0.01 * jax.random.normal(k_b, (FEAT_DIM,), dtype=jnp.float32)
    # GaussianLayer: centers = 0.5 * randn, covs = 0.2 + Exp(scale=0.5)
    centers = 0.5 * jax.random.normal(k_c, (N_CLASSES, FEAT_DIM), dtype=jnp.float32)
    covs = 0.2 + 0.5 * jax.random.exponential(k_v, (N_CLASSES, FEAT_DIM),
                                              dtype=jnp.float32)

    out = resnet_gaussian_forward(x, w, b, centers, covs)
    out = jax.block_until_ready(out)
    assert out.shape == (B, N_CLASSES) and out.dtype == jnp.float32

    ref = _reference_forward(x, w, b, centers, covs)
    max_err = float(jnp.max(jnp.abs(out - ref)))
    assert jnp.allclose(out, ref, rtol=1e-3, atol=1e-1), f"max_err={max_err}"

    print("KERNEL_OK")
</pallas_src>

<mosaic_0001>
module attributes {stable_mosaic.version = 11 : i64} {
  func.func @_fused_kernel(%arg0: i32, %arg1: memref<8x16x4xbf16, #tpu.memory_space<vmem>>, %arg2: memref<4x512xbf16, #tpu.memory_space<vmem>>, %arg3: memref<1x512xf32, #tpu.memory_space<vmem>>, %arg4: memref<1024x128xf32, #tpu.memory_space<vmem>>, %arg5: memref<1x128xf32, #tpu.memory_space<vmem>>, %arg6: memref<8x128xf32, #tpu.memory_space<vmem>>) attributes {dimension_semantics = [#tpu.dimension_semantics<parallel>], iteration_bounds = array<i64: 1>, scalar_prefetch = 0 : i64, scratch_operands = 0 : i64, tpu.core_type = #tpu.core_type<tc>, window_params = [{transform_indices = @transform_0, window_bounds = array<i64: 8, 16, 4>}, {pipeline_mode = #tpu.pipeline_mode<synchronous>, transform_indices = @transform_1, window_bounds = array<i64: 4, 512>}, {pipeline_mode = #tpu.pipeline_mode<synchronous>, transform_indices = @transform_2, window_bounds = array<i64: 1, 512>}, {pipeline_mode = #tpu.pipeline_mode<synchronous>, transform_indices = @transform_3, window_bounds = array<i64: 1024, 128>}, {pipeline_mode = #tpu.pipeline_mode<synchronous>, transform_indices = @transform_4, window_bounds = array<i64: 1, 128>}, {transform_indices = @transform_5, window_bounds = array<i64: 8, 128>}]} {
    %c0 = arith.constant 0 : index
    %c0_0 = arith.constant 0 : index
    %c0_1 = arith.constant 0 : index
    %0 = vector.load %arg1[%c0, %c0_0, %c0_1] : memref<8x16x4xbf16, #tpu.memory_space<vmem>>, vector<8x16x4xbf16>
    %1 = vector.shape_cast %0 : vector<8x16x4xbf16> to vector<128x4xbf16>
    %c0_2 = arith.constant 0 : index
    %c0_3 = arith.constant 0 : index
    %2 = vector.load %arg2[%c0_2, %c0_3] : memref<4x512xbf16, #tpu.memory_space<vmem>>, vector<4x512xbf16>
    %cst = arith.constant dense<0.000000e+00> : vector<128x512xf32>
    %3 = tpu.matmul %1, %2, %cst {dimension_numbers = #tpu.dot_dimension_numbers<[1], [0], [0], [1], [0, 0, 1, 1], [], []>} : vector<128x4xbf16>, vector<4x512xbf16>, vector<128x512xf32> -> vector<128x512xf32>
    %c0_4 = arith.constant 0 : index
    %c0_5 = arith.constant 0 : index
    %4 = vector.load %arg3[%c0_4, %c0_5] : memref<1x512xf32, #tpu.memory_space<vmem>>, vector<1x512xf32>
    %5 = vector.broadcast %4 : vector<1x512xf32> to vector<128x512xf32>
    %6 = arith.addf %3, %5 : vector<128x512xf32>
    %cst_6 = arith.constant 0.000000e+00 : f32
    %7 = vector.broadcast %cst_6 : f32 to vector<128x512xf32>
    %8 = arith.maximumf %6, %7 : vector<128x512xf32>
    %9 = vector.shape_cast %8 : vector<128x512xf32> to vector<8x16x512xf32>
    %cst_7 = arith.constant dense<0.000000e+00> : vector<8x512xf32>
    %10 = vector.multi_reduction <add>, %9, %cst_7 [1] : vector<8x16x512xf32> to vector<8x512xf32>
    %11 = arith.mulf %10, %10 : vector<8x512xf32>
    %12 = tpu.concatenate %11, %10 in 1 : vector<8x512xf32>, vector<8x512xf32> -> vector<8x1024xf32>
    %c0_8 = arith.constant 0 : index
    %c0_9 = arith.constant 0 : index
    %13 = vector.load %arg4[%c0_8, %c0_9] : memref<1024x128xf32, #tpu.memory_space<vmem>>, vector<1024x128xf32>
    %cst_10 = arith.constant dense<0.000000e+00> : vector<8x128xf32>
    %14 = tpu.matmul %12, %13, %cst_10 {dimension_numbers = #tpu.dot_dimension_numbers<[1], [0], [0], [1], [0, 0, 1, 1], [], []>} : vector<8x1024xf32>, vector<1024x128xf32>, vector<8x128xf32> -> vector<8x128xf32>
    %c0_11 = arith.constant 0 : index
    %c0_12 = arith.constant 0 : index
    %15 = vector.load %arg5[%c0_11, %c0_12] : memref<1x128xf32, #tpu.memory_space<vmem>>, vector<1x128xf32>
    %16 = vector.broadcast %15 : vector<1x128xf32> to vector<8x128xf32>
    %17 = arith.addf %14, %16 : vector<8x128xf32>
    %c0_13 = arith.constant 0 : index
    %c0_14 = arith.constant 0 : index
    %18 = vector.load %arg6[%c0_13, %c0_14] : memref<8x128xf32, #tpu.memory_space<vmem>>, vector<8x128xf32>
    tpu.vector_store %arg6[%c0_13, %c0_14], %17 {strides = array<i32>} : memref<8x128xf32, #tpu.memory_space<vmem>>, vector<8x128xf32>,
    return
  }
  func.func @transform_0(%arg0: i32) -> (i32, i32, i32) {
    %c0_i32 = arith.constant 0 : i32
    %c0_i32_0 = arith.constant 0 : i32
    %c0_i32_1 = arith.constant 0 : i32
    return %arg0, %c0_i32, %c0_i32_0 : i32, i32, i32
  }
  func.func @transform_1(%arg0: i32) -> (i32, i32) {
    %c0_i32 = arith.constant 0 : i32
    %c0_i32_0 = arith.constant 0 : i32
    %c0_i32_1 = arith.constant 0 : i32
    return %c0_i32, %c0_i32_0 : i32, i32
  }
  func.func @transform_2(%arg0: i32) -> (i32, i32) {
    %c0_i32 = arith.constant 0 : i32
    %c0_i32_0 = arith.constant 0 : i32
    %c0_i32_1 = arith.constant 0 : i32
    return %c0_i32, %c0_i32_0 : i32, i32
  }
  func.func @transform_3(%arg0: i32) -> (i32, i32) {
    %c0_i32 = arith.constant 0 : i32
    %c0_i32_0 = arith.constant 0 : i32
    %c0_i32_1 = arith.constant 0 : i32
    return %c0_i32, %c0_i32_0 : i32, i32
  }
  func.func @transform_4(%arg0: i32) -> (i32, i32) {
    %c0_i32 = arith.constant 0 : i32
    %c0_i32_0 = arith.constant 0 : i32
    %c0_i32_1 = arith.constant 0 : i32
    return %c0_i32, %c0_i32_0 : i32, i32
  }
  func.func @transform_5(%arg0: i32) -> (i32, i32) {
    %c0_i32 = arith.constant 0 : i32
    %c0_i32_0 = arith.constant 0 : i32
    return %arg0, %c0_i32 : i32, i32
  }
}

</mosaic_0001>

<llo_original>
// kernel: tpu_custom_call.1
$region0: #{tpu_custom_call.1}
  #allocation0 [shape = 'u32[]', space=smem, size = 0x4, offset = 0x4, fixed_abs, tag = 'smem constant byte address 0x4 - core index']
  #allocation1 [shape = 'u32[144,128]{1,0:T(1,128)}', space=vmem, size = 0x12000, scoped, tag = 'internal scratch']
  %s0 = inlined_call_operand.vmem [shape: bf16[8,16,4], index: 0, kind: input, shape index: {}]
  %s1 = inlined_call_operand.vmem [shape: bf16[4,512], index: 1, kind: input, shape index: {}]
  %s2 = inlined_call_operand.vmem [shape: f32[1,512], index: 2, kind: input, shape index: {}]
  %s3 = inlined_call_operand.hbm [shape: f32[1024,128], index: 3, kind: input, shape index: {}]
  %s4 = inlined_call_operand.vmem [shape: f32[1,128], index: 4, kind: input, shape index: {}]
  %s5 = inlined_call_operand.hbm [shape: f32[8,128], index: 5, kind: output, shape index: {}]
  %s6 = sld [smem:[#allocation0]]
  $region34: #{tpu_custom_call.1} parent=0
    _
  %s8 = ssub.s32 1, %s6
  %s9 = scalar_select 0, %s8, %s6
  $region1: #{tpu_custom_call.1} parent=0
    #allocation2 [shape = 'u8[524288]{0}', space=vmem, size = 0x80000, scoped, tag = 'input window, operand 3, single buffered']
    #allocation3 [shape = 's32[1]{0}', space=sflag, size = 0x4, scoped, tag = 'scoped memory for tpu_custom_call.1']
    #allocation4 [shape = 's32[1]{0}', space=sflag, size = 0x4, scoped, tag = 'scoped memory for tpu_custom_call.1']
    #allocation5 [shape = 'u8[4096]{0}', space=vmem, size = 0x1000, scoped, tag = 'output window, operand 0, single buffered']
    %10 = vsyncpa [#allocation3], 0
    %11 = vsyncpa [#allocation4], 0
    // Predicated region
    $region2: #{tpu_custom_call.1} parent=1 // pred_check
      _
    $region3: #{tpu_custom_call.1} parent=1 // pred_check_branch
      %13 = sbr.rel (0) target = $region5
    $region4: #{tpu_custom_call.1} parent=1 // pred_region
      _
    $region5: #{tpu_custom_call.1} parent=1 // pred_fallthru
      _
    // Predicated region
    $region6: #{tpu_custom_call.1} parent=1 // pred_check
      _
    $region7: #{tpu_custom_call.1} parent=1 // pred_check_branch
      %15 = sbr.rel (0) target = $region9
    $region8: #{tpu_custom_call.1} parent=1 // pred_region
      _
    $region9: #{tpu_custom_call.1} parent=1 // pred_fallthru
      _
    // Predicated region
    $region10: #{tpu_custom_call.1} parent=1 // pred_check
      _
    $region11: #{tpu_custom_call.1} parent=1 // pred_check_branch
      %17 = sbr.rel (0) target = $region13
    $region12: #{tpu_custom_call.1} parent=1 // pred_region
      _
    $region13: #{tpu_custom_call.1} parent=1 // pred_fallthru
      _
    // Predicated region
    $region14: #{tpu_custom_call.1} parent=1 // pred_check
      _
    $region15: #{tpu_custom_call.1} parent=1 // pred_check_branch
      %19 = sbr.rel (0) target = $region17
    $region16: #{tpu_custom_call.1} parent=1 // pred_region
      %s21 = ssub.s32 16384, 16384
      %22 = vsyncadd [#allocation3], %s21
      %s23 = sshll.u32 [#allocation2], 4
      %s24 = int_to_ptr.vmem [resolvable:$true] %s23
      %29 = dma.hbm_to_vmem [thread:$0]  %s3, 16384, %s24, [#allocation3], 128, 128, 8
    $region17: #{tpu_custom_call.1} parent=1 // pred_fallthru
      _
    // Predicated region
    $region18: #{tpu_custom_call.1} parent=1 // pred_check
      _
    $region19: #{tpu_custom_call.1} parent=1 // pred_check_branch
      %31 = sbr.rel (0) target = $region21
    $region20: #{tpu_custom_call.1} parent=1 // pred_region
      _
    $region21: #{tpu_custom_call.1} parent=1 // pred_fallthru
      _
    // Predicated region
    $region22: #{tpu_custom_call.1} parent=1 // pred_check
      _
    $region23: #{tpu_custom_call.1} parent=1 // pred_check_branch
      %33 = sbr.rel (0) target = $region25
    $region24: #{tpu_custom_call.1} parent=1 // pred_region
      %34 = dma.done [#allocation3], 16384
    $region25: #{tpu_custom_call.1} parent=1 // pred_fallthru
      _
    %v36 = vld [vmem:[%s0] sm:$0xf]
    %v37 = vld [vmem:[%s0 + $0x4] sm:$0xf]
    %v38 = vld [vmem:[%s0 + $0x8] sm:$0xf]
    %v39 = vld [vmem:[%s0 + $0xc] sm:$0xf]
    %v40 = vld [vmem:[%s0 + $0x10] sm:$0xf]
    %v41 = vld [vmem:[%s0 + $0x14] sm:$0xf]
    %v42 = vld [vmem:[%s0 + $0x18] sm:$0xf]
    %v43 = vld [vmem:[%s0 + $0x1c] sm:$0xf]
    %v44 = vld [vmem:[%s0 + $0x20] sm:$0xf]
    %v45 = vld [vmem:[%s0 + $0x24] sm:$0xf]
    %v46 = vld [vmem:[%s0 + $0x28] sm:$0xf]
    %v47 = vld [vmem:[%s0 + $0x2c] sm:$0xf]
    %v48 = vld [vmem:[%s0 + $0x30] sm:$0xf]
    %v49 = vld [vmem:[%s0 + $0x34] sm:$0xf]
    %v50 = vld [vmem:[%s0 + $0x38] sm:$0xf]
    %v51 = vld [vmem:[%s0 + $0x3c] sm:$0xf]
    %v52 = vld [vmem:[%s1] sm:$0xff]
    %v53 = vld [vmem:[%s2] sm:$0xf]
    %v55 = vlaneseq
    %v56 = vshrl.u32 %v55, 7
    %v57 = vsub.s32 0, %v56
    %v58 = vrot.slane %v53, %v57
    %v59 = vlaneseq
    %v60 = vshrl.u32 %v59, 7
    %v61 = vsub.s32 1, %v60
    %v62 = vrot.slane %v53, %v61
    %v63 = vlaneseq
    %v64 = vshrl.u32 %v63, 7
    %v65 = vsub.s32 2, %v64
    %v66 = vrot.slane %v53, %v65
    %v67 = vlaneseq
    %v68 = vshrl.u32 %v67, 7
    %v69 = vsub.s32 3, %v68
    %v70 = vrot.slane %v53, %v69
    %v91 = vunpack.c.l.b16 %v36
    %v92 = vunpack.c.l.b16 %v37
    %v93 = vunpack.c.l.b16 %v38
    %v94 = vunpack.c.l.b16 %v39
    %v95 = vunpack.c.l.b16 %v40
    %v96 = vunpack.c.l.b16 %v41
    %v97 = vunpack.c.l.b16 %v42
    %v98 = vunpack.c.l.b16 %v43
    %v99 = vunpack.c.l.b16 %v44
    %v100 = vunpack.c.l.b16 %v45
    %v101 = vunpack.c.l.b16 %v46
    %v102 = vunpack.c.l.b16 %v47
    %v103 = vunpack.c.l.b16 %v48
    %v104 = vunpack.c.l.b16 %v49
    %v105 = vunpack.c.l.b16 %v50
    %v106 = vunpack.c.l.b16 %v51
    %v107 = vpack.c.b16 %v92, %v91
    %v108 = vpack.c.b16 %v94, %v93
    %v109 = vpack.c.b16 %v96, %v95
    %v110 = vpack.c.b16 %v98, %v97
    %v111 = vpack.c.b16 %v100, %v99
    %v112 = vpack.c.b16 %v102, %v101
    %v113 = vpack.c.b16 %v104, %v103
    %v114 = vpack.c.b16 %v106, %v105
    %v116 = vcombine.high %v52, %v52
    %v118 = vunpack.c.l.s4 1983009808
    %v119 = vunpack.c.0.s8 %v118
    %v120 = vlaneseq
    %v121 = vshrl.u32 %v120, 7
    %v122 = vsub.s32 %v119, %v121
    %v123 = vrot.slane %v52, %v122
    %v125 = vunpack.c.l.s4 1983009808
    %v126 = vunpack.c.0.s8 %v125
    %v127 = vlaneseq
    %v128 = vshrl.u32 %v127, 7
    %v129 = vsub.s32 %v126, %v128
    %v130 = vrot.slane %v116, %v129
    %v131 = vcombine.high %v123, %v123
    %v132 = vcombine.high %v130, %v130
    %vm133 = vcmask 31744
    %v135 = vsel %vm133, %v107, 0
    %v138 = vsel %vm133, %v108, 0
    %v141 = vsel %vm133, %v109, 0
    %v144 = vsel %vm133, %v110, 0
    %v147 = vsel %vm133, %v111, 0
    %v150 = vsel %vm133, %v112, 0
    %v153 = vsel %vm133, %v113, 0
    %v156 = vsel %vm133, %v114, 0
    %vm158 = vcmask 1041408
    %v160 = vsel %vm158, %v123, 0
    %v163 = vsel %vm158, %v131, 0
    %v166 = vsel %vm158, %v130, 0
    %v169 = vsel %vm158, %v132, 0
    %171 = vmatprep.subr.bf16.mxu0 %v163
    %172 = vmatpush1.bf16.msra.mxu0 %v160
    %173 = vmatprep.subr.bf16.mxu0 0
    %174 = vmatpush1.bf16.msra.mxu0 0
    %175 = vmatprep.subr.bf16.mxu0 0
    %176 = vmatpush1.bf16.msra.mxu0 0
    %177 = vmatprep.subr.bf16.mxu0 0
    %178 = vmatpush1.bf16.msra.mxu0 0
    %179 = vmatprep.subr.bf16.mxu0 0
    %180 = vmatpush1.bf16.msra.mxu0 0
    %181 = vmatprep.subr.bf16.mxu0 0
    %182 = vmatpush1.bf16.msra.mxu0 0
    %183 = vmatprep.subr.bf16.mxu0 0
    %184 = vmatpush1.bf16.msra.mxu0 0
    %185 = vmatprep.subr.bf16.mxu0 0
    %186 = vmatpush1.bf16.msra.mxu0 0
    %187 = vmatprep.subr.bf16.mxu0 0
    %188 = vmatpush1.bf16.msra.mxu0 0
    %189 = vmatprep.subr.bf16.mxu0 0
    %190 = vmatpush1.bf16.msra.mxu0 0
    %191 = vmatprep.subr.bf16.mxu0 0
    %192 = vmatpush1.bf16.msra.mxu0 0
    %193 = vmatprep.subr.bf16.mxu0 0
    %194 = vmatpush1.bf16.msra.mxu0 0
    %195 = vmatprep.subr.bf16.mxu0 0
    %196 = vmatpush1.bf16.msra.mxu0 0
    %197 = vmatprep.subr.bf16.mxu0 0
    %198 = vmatpush1.bf16.msra.mxu0 0
    %199 = vmatprep.subr.bf16.mxu0 0
    %200 = vmatpush1.bf16.msra.mxu0 0
    %201 = vmatprep.subr.bf16.mxu0 0
    %202 = vmatpush1.bf16.msra.mxu0 0
    %203 = vmatprep.mubr.bf16.mxu0 0
    %204 = vmatmul.mubr.bf16.gmra.mrb[0].mxu0 %v135
    %v205 = vpop.f32.mrb[0].mxu0
    %v206 = vadd.f32 %v58, %v205
    %v207 = vpop.f32.mrb[0].mxu0
    %v208 = vadd.f32 %v62, %v207
    %v209 = vpop.f32.mrb[0].mxu0
    %v210 = vadd.f32 %v58, %v209
    %v211 = vpop.f32.mrb[0].mxu0
    %v212 = vadd.f32 %v62, %v211
    %213 = vmatprep.mubr.bf16.mxu0 0
    %214 = vmatmul.mubr.bf16.gmra.mrb[0].mxu0 %v138
    %v215 = vpop.f32.mrb[0].mxu0
    %v216 = vadd.f32 %v58, %v215
    %v217 = vpop.f32.mrb[0].mxu0
    %v218 = vadd.f32 %v62, %v217
    %v219 = vpop.f32.mrb[0].mxu0
    %v220 = vadd.f32 %v58, %v219
    %v221 = vpop.f32.mrb[0].mxu0
    %v222 = vadd.f32 %v62, %v221
    %223 = vmatprep.mubr.bf16.mxu0 0
    %224 = vmatmul.mubr.bf16.gmra.mrb[0].mxu0 %v141
    %v225 = vpop.f32.mrb[0].mxu0
    %v226 = vadd.f32 %v58, %v225
    %v227 = vpop.f32.mrb[0].mxu0
    %v228 = vadd.f32 %v62, %v227
    %v229 = vpop.f32.mrb[0].mxu0
    %v230 = vadd.f32 %v58, %v229
    %v231 = vpop.f32.mrb[0].mxu0
    %v232 = vadd.f32 %v62, %v231
    %233 = vmatprep.mubr.bf16.mxu0 0
    %234 = vmatmul.mubr.bf16.gmra.mrb[0].mxu0 %v144
    %v235 = vpop.f32.mrb[0].mxu0
    %v236 = vadd.f32 %v58, %v235
    %v237 = vpop.f32.mrb[0].mxu0
    %v238 = vadd.f32 %v62, %v237
    %v239 = vpop.f32.mrb[0].mxu0
    %v240 = vadd.f32 %v58, %v239
    %v241 = vpop.f32.mrb[0].mxu0
    %v242 = vadd.f32 %v62, %v241
    %243 = vmatprep.mubr.bf16.mxu0 0
    %244 = vmatmul.mubr.bf16.gmra.mrb[0].mxu0 %v147
    %v245 = vpop.f32.mrb[0].mxu0
    %v246 = vadd.f32 %v58, %v245
    %v247 = vpop.f32.mrb[0].mxu0
    %v248 = vadd.f32 %v62, %v247
    %v249 = vpop.f32.mrb[0].mxu0
    %v250 = vadd.f32 %v58, %v249
    %v251 = vpop.f32.mrb[0].mxu0
    %v252 = vadd.f32 %v62, %v251
    %253 = vmatprep.mubr.bf16.mxu0 0
    %254 = vmatmul.mubr.bf16.gmra.mrb[0].mxu0 %v150
    %v255 = vpop.f32.mrb[0].mxu0
    %v256 = vadd.f32 %v58, %v255
    %v257 = vpop.f32.mrb[0].mxu0
    %v258 = vadd.f32 %v62, %v257
    %v259 = vpop.f32.mrb[0].mxu0
    %v260 = vadd.f32 %v58, %v259
    %v261 = vpop.f32.mrb[0].mxu0
    %v262 = vadd.f32 %v62, %v261
    %263 = vmatprep.mubr.bf16.mxu0 0
    %264 = vmatmul.mubr.bf16.gmra.mrb[0].mxu0 %v153
    %v265 = vpop.f32.mrb[0].mxu0
    %v266 = vadd.f32 %v58, %v265
    %v267 = vpop.f32.mrb[0].mxu0
    %v268 = vadd.f32 %v62, %v267
    %v269 = vpop.f32.mrb[0].mxu0
    %v270 = vadd.f32 %v58, %v269
    %v271 = vpop.f32.mrb[0].mxu0
    %v272 = vadd.f32 %v62, %v271
    %273 = vmatprep.mubr.bf16.mxu0 0
    %274 = vmatmul.mubr.bf16.gmra.mrb[0].mxu0 %v156
    %v275 = vpop.f32.mrb[0].mxu0
    %v276 = vadd.f32 %v58, %v275
    %v277 = vpop.f32.mrb[0].mxu0
    %v278 = vadd.f32 %v62, %v277
    %v279 = vpop.f32.mrb[0].mxu0
    %v280 = vadd.f32 %v58, %v279
    %v281 = vpop.f32.mrb[0].mxu0
    %v282 = vadd.f32 %v62, %v281
    %283 = vdwg.mxu0
    %284 = vmatprep.subr.bf16.mxu0 %v169
    %285 = vmatpush1.bf16.msra.mxu0 %v166
    %286 = vmatprep.subr.bf16.mxu0 0
    %287 = vmatpush1.bf16.msra.mxu0 0
    %288 = vmatprep.subr.bf16.mxu0 0
    %289 = vmatpush1.bf16.msra.mxu0 0
    %290 = vmatprep.subr.bf16.mxu0 0
    %291 = vmatpush1.bf16.msra.mxu0 0
    %292 = vmatprep.subr.bf16.mxu0 0
    %293 = vmatpush1.bf16.msra.mxu0 0
    %294 = vmatprep.subr.bf16.mxu0 0
    %295 = vmatpush1.bf16.msra.mxu0 0
    %296 = vmatprep.subr.bf16.mxu0 0
    %297 = vmatpush1.bf16.msra.mxu0 0
    %298 = vmatprep.subr.bf16.mxu0 0
    %299 = vmatpush1.bf16.msra.mxu0 0
    %300 = vmatprep.subr.bf16.mxu0 0
    %301 = vmatpush1.bf16.msra.mxu0 0
    %302 = vmatprep.subr.bf16.mxu0 0
    %303 = vmatpush1.bf16.msra.mxu0 0
    %304 = vmatprep.subr.bf16.mxu0 0
    %305 = vmatpush1.bf16.msra.mxu0 0
    %306 = vmatprep.subr.bf16.mxu0 0
    %307 = vmatpush1.bf16.msra.mxu0 0
    %308 = vmatprep.subr.bf16.mxu0 0
    %309 = vmatpush1.bf16.msra.mxu0 0
    %310 = vmatprep.subr.bf16.mxu0 0
    %311 = vmatpush1.bf16.msra.mxu0 0
    %312 = vmatprep.subr.bf16.mxu0 0
    %313 = vmatpush1.bf16.msra.mxu0 0
    %314 = vmatprep.subr.bf16.mxu0 0
    %315 = vmatpush1.bf16.msra.mxu0 0
    %316 = vmatprep.mubr.bf16.mxu0 0
    %317 = vmatmul.mubr.bf16.gmra.mrb[0].mxu0 %v135
    %v318 = vpop.f32.mrb[0].mxu0
    %v319 = vadd.f32 %v66, %v318
    %v320 = vpop.f32.mrb[0].mxu0
    %v321 = vadd.f32 %v70, %v320
    %v322 = vpop.f32.mrb[0].mxu0
    %v323 = vadd.f32 %v66, %v322
    %v324 = vpop.f32.mrb[0].mxu0
    %v325 = vadd.f32 %v70, %v324
    %326 = vmatprep.mubr.bf16.mxu0 0
    %327 = vmatmul.mubr.bf16.gmra.mrb[0].mxu0 %v138
    %v328 = vpop.f32.mrb[0].mxu0
    %v329 = vadd.f32 %v66, %v328
    %v330 = vpop.f32.mrb[0].mxu0
    %v331 = vadd.f32 %v70, %v330
    %v332 = vpop.f32.mrb[0].mxu0
    %v333 = vadd.f32 %v66, %v332
    %v334 = vpop.f32.mrb[0].mxu0
    %v335 = vadd.f32 %v70, %v334
    %336 = vmatprep.mubr.bf16.mxu0 0
    %337 = vmatmul.mubr.bf16.gmra.mrb[0].mxu0 %v141
    %v338 = vpop.f32.mrb[0].mxu0
    %v339 = vadd.f32 %v66, %v338
    %v340 = vpop.f32.mrb[0].mxu0
    %v341 = vadd.f32 %v70, %v340
    %v342 = vpop.f32.mrb[0].mxu0
    %v343 = vadd.f32 %v66, %v342
    %v344 = vpop.f32.mrb[0].mxu0
    %v345 = vadd.f32 %v70, %v344
    %346 = vmatprep.mubr.bf16.mxu0 0
    %347 = vmatmul.mubr.bf16.gmra.mrb[0].mxu0 %v144
    %v348 = vpop.f32.mrb[0].mxu0
    %v349 = vadd.f32 %v66, %v348
    %v350 = vpop.f32.mrb[0].mxu0
    %v351 = vadd.f32 %v70, %v350
    %v352 = vpop.f32.mrb[0].mxu0
    %v353 = vadd.f32 %v66, %v352
    %v354 = vpop.f32.mrb[0].mxu0
    %v355 = vadd.f32 %v70, %v354
    %356 = vmatprep.mubr.bf16.mxu0 0
    %357 = vmatmul.mubr.bf16.gmra.mrb[0].mxu0 %v147
    %v358 = vpop.f32.mrb[0].mxu0
    %v359 = vadd.f32 %v66, %v358
    %v360 = vpop.f32.mrb[0].mxu0
    %v361 = vadd.f32 %v70, %v360
    %v362 = vpop.f32.mrb[0].mxu0
    %v363 = vadd.f32 %v66, %v362
    %v364 = vpop.f32.mrb[0].mxu0
    %v365 = vadd.f32 %v70, %v364
    %366 = vmatprep.mubr.bf16.mxu0 0
    %367 = vmatmul.mubr.bf16.gmra.mrb[0].mxu0 %v150
    %v368 = vpop.f32.mrb[0].mxu0
    %v369 = vadd.f32 %v66, %v368
    %v370 = vpop.f32.mrb[0].mxu0
    %v371 = vadd.f32 %v70, %v370
    %v372 = vpop.f32.mrb[0].mxu0
    %v373 = vadd.f32 %v66, %v372
    %v374 = vpop.f32.mrb[0].mxu0
    %v375 = vadd.f32 %v70, %v374
    %376 = vmatprep.mubr.bf16.mxu0 0
    %377 = vmatmul.mubr.bf16.gmra.mrb[0].mxu0 %v153
    %v378 = vpop.f32.mrb[0].mxu0
    %v379 = vadd.f32 %v66, %v378
    %v380 = vpop.f32.mrb[0].mxu0
    %v381 = vadd.f32 %v70, %v380
    %v382 = vpop.f32.mrb[0].mxu0
    %v383 = vadd.f32 %v66, %v382
    %v384 = vpop.f32.mrb[0].mxu0
    %v385 = vadd.f32 %v70, %v384
    %386 = vmatprep.mubr.bf16.mxu0 0
    %387 = vmatmul.mubr.bf16.gmra.mrb[0].mxu0 %v156
    %v388 = vpop.f32.mrb[0].mxu0
    %v389 = vadd.f32 %v66, %v388
    %v390 = vpop.f32.mrb[0].mxu0
    %v391 = vadd.f32 %v70, %v390
    %v392 = vpop.f32.mrb[0].mxu0
    %v393 = vadd.f32 %v66, %v392
    %v394 = vpop.f32.mrb[0].mxu0
    %v395 = vadd.f32 %v70, %v394
    %396 = vdwg.mxu0
    %v397 = vmax.f32 %v206, 0.0
    %v398 = vmax.f32 %v208, 0.0
    %v399 = vmax.f32 %v319, 0.0
    %v400 = vmax.f32 %v321, 0.0
    %v401 = vmax.f32 %v210, 0.0
    %v402 = vmax.f32 %v212, 0.0
    %v403 = vmax.f32 %v323, 0.0
    %v404 = vmax.f32 %v325, 0.0
    %v405 = vmax.f32 %v216, 0.0
    %v406 = vmax.f32 %v218, 0.0
    %v407 = vmax.f32 %v329, 0.0
    %v408 = vmax.f32 %v331, 0.0
    %v409 = vmax.f32 %v220, 0.0
    %v410 = vmax.f32 %v222, 0.0
    %v411 = vmax.f32 %v333, 0.0
    %v412 = vmax.f32 %v335, 0.0
    %v413 = vmax.f32 %v226, 0.0
    %v414 = vmax.f32 %v228, 0.0
    %v415 = vmax.f32 %v339, 0.0
    %v416 = vmax.f32 %v341, 0.0
    %v417 = vmax.f32 %v230, 0.0
    %v418 = vmax.f32 %v232, 0.0
    %v419 = vmax.f32 %v343, 0.0
    %v420 = vmax.f32 %v345, 0.0
    %v421 = vmax.f32 %v236, 0.0
    %v422 = vmax.f32 %v238, 0.0
    %v423 = vmax.f32 %v349, 0.0
    %v424 = vmax.f32 %v351, 0.0
    %v425 = vmax.f32 %v240, 0.0
    %v426 = vmax.f32 %v242, 0.0
    %v427 = vmax.f32 %v353, 0.0
    %v428 = vmax.f32 %v355, 0.0
    %v429 = vmax.f32 %v246, 0.0
    %v430 = vmax.f32 %v248, 0.0
    %v431 = vmax.f32 %v359, 0.0
    %v432 = vmax.f32 %v361, 0.0
    %v433 = vmax.f32 %v250, 0.0
    %v434 = vmax.f32 %v252, 0.0
    %v435 = vmax.f32 %v363, 0.0
    %v436 = vmax.f32 %v365, 0.0
    %v437 = vmax.f32 %v256, 0.0
    %v438 = vmax.f32 %v258, 0.0
    %v439 = vmax.f32 %v369, 0.0
    %v440 = vmax.f32 %v371, 0.0
    %v441 = vmax.f32 %v260, 0.0
    %v442 = vmax.f32 %v262, 0.0
    %v443 = vmax.f32 %v373, 0.0
    %v444 = vmax.f32 %v375, 0.0
    %v445 = vmax.f32 %v266, 0.0
    %v446 = vmax.f32 %v268, 0.0
    %v447 = vmax.f32 %v379, 0.0
    %v448 = vmax.f32 %v381, 0.0
    %v449 = vmax.f32 %v270, 0.0
    %v450 = vmax.f32 %v272, 0.0
    %v451 = vmax.f32 %v383, 0.0
    %v452 = vmax.f32 %v385, 0.0
    %v453 = vmax.f32 %v276, 0.0
    %v454 = vmax.f32 %v278, 0.0
    %v455 = vmax.f32 %v389, 0.0
    %v456 = vmax.f32 %v391, 0.0
    %v457 = vmax.f32 %v280, 0.0
    %v458 = vmax.f32 %v282, 0.0
    %v459 = vmax.f32 %v393, 0.0
    %v460 = vmax.f32 %v395, 0.0
    %v461 = vadd.f32 %v397, %v401
    %v462 = vrot.slane %v461, 4
    %v463 = vadd.f32 %v461, %v462
    %v464 = vrot.slane %v463, 2
    %v465 = vadd.f32 %v463, %v464
    %v466 = vrot.slane %v465, 1
    %v467 = vadd.f32 %v465, %v466
    %v468 = vadd.f32 %v398, %v402
    %v469 = vrot.slane %v468, 4
    %v470 = vadd.f32 %v468, %v469
    %v471 = vrot.slane %v470, 2
    %v472 = vadd.f32 %v470, %v471
    %v473 = vrot.slane %v472, 1
    %v474 = vadd.f32 %v472, %v473
    %v475 = vadd.f32 %v399, %v403
    %v476 = vrot.slane %v475, 4
    %v477 = vadd.f32 %v475, %v476
    %v478 = vrot.slane %v477, 2
    %v479 = vadd.f32 %v477, %v478
    %v480 = vrot.slane %v479, 1
    %v481 = vadd.f32 %v479, %v480
    %v482 = vadd.f32 %v400, %v404
    %v483 = vrot.slane %v482, 4
    %v484 = vadd.f32 %v482, %v483
    %v485 = vrot.slane %v484, 2
    %v486 = vadd.f32 %v484, %v485
    %v487 = vrot.slane %v486, 1
    %v488 = vadd.f32 %v486, %v487
    %v489 = vadd.f32 %v405, %v409
    %v490 = vrot.slane %v489, 4
    %v491 = vadd.f32 %v489, %v490
    %v492 = vrot.slane %v491, 2
    %v493 = vadd.f32 %v491, %v492
    %v494 = vrot.slane %v493, 1
    %v495 = vadd.f32 %v493, %v494
    %v496 = vadd.f32 %v406, %v410
    %v497 = vrot.slane %v496, 4
    %v498 = vadd.f32 %v496, %v497
    %v499 = vrot.slane %v498, 2
    %v500 = vadd.f32 %v498, %v499
    %v501 = vrot.slane %v500, 1
    %v502 = vadd.f32 %v500, %v501
    %v503 = vadd.f32 %v407, %v411
    %v504 = vrot.slane %v503, 4
    %v505 = vadd.f32 %v503, %v504
    %v506 = vrot.slane %v505, 2
    %v507 = vadd.f32 %v505, %v506
    %v508 = vrot.slane %v507, 1
    %v509 = vadd.f32 %v507, %v508
    %v510 = vadd.f32 %v408, %v412
    %v511 = vrot.slane %v510, 4
    %v512 = vadd.f32 %v510, %v511
    %v513 = vrot.slane %v512, 2
    %v514 = vadd.f32 %v512, %v513
    %v515 = vrot.slane %v514, 1
    %v516 = vadd.f32 %v514, %v515
    %v517 = vadd.f32 %v413, %v417
    %v518 = vrot.slane %v517, 4
    %v519 = vadd.f32 %v517, %v518
    %v520 = vrot.slane %v519, 2
    %v521 = vadd.f32 %v519, %v520
    %v522 = vrot.slane %v521, 1
    %v523 = vadd.f32 %v521, %v522
    %v524 = vadd.f32 %v414, %v418
    %v525 = vrot.slane %v524, 4
    %v526 = vadd.f32 %v524, %v525
    %v527 = vrot.slane %v526, 2
    %v528 = vadd.f32 %v526, %v527
    %v529 = vrot.slane %v528, 1
    %v530 = vadd.f32 %v528, %v529
    %v531 = vadd.f32 %v415, %v419
    %v532 = vrot.slane %v531, 4
    %v533 = vadd.f32 %v531, %v532
    %v534 = vrot.slane %v533, 2
    %v535 = vadd.f32 %v533, %v534
    %v536 = vrot.slane %v535, 1
    %v537 = vadd.f32 %v535, %v536
    %v538 = vadd.f32 %v416, %v420
    %v539 = vrot.slane %v538, 4
    %v540 = vadd.f32 %v538, %v539
    %v541 = vrot.slane %v540, 2
    %v542 = vadd.f32 %v540, %v541
    %v543 = vrot.slane %v542, 1
    %v544 = vadd.f32 %v542, %v543
    %v545 = vadd.f32 %v421, %v425
    %v546 = vrot.slane %v545, 4
    %v547 = vadd.f32 %v545, %v546
    %v548 = vrot.slane %v547, 2
    %v549 = vadd.f32 %v547, %v548
    %v550 = vrot.slane %v549, 1
    %v551 = vadd.f32 %v549, %v550
    %v552 = vadd.f32 %v422, %v426
    %v553 = vrot.slane %v552, 4
    %v554 = vadd.f32 %v552, %v553
    %v555 = vrot.slane %v554, 2
    %v556 = vadd.f32 %v554, %v555
    %v557 = vrot.slane %v556, 1
    %v558 = vadd.f32 %v556, %v557
    %v559 = vadd.f32 %v423, %v427
    %v560 = vrot.slane %v559, 4
    %v561 = vadd.f32 %v559, %v560
    %v562 = vrot.slane %v561, 2
    %v563 = vadd.f32 %v561, %v562
    %v564 = vrot.slane %v563, 1
    %v565 = vadd.f32 %v563, %v564
    %v566 = vadd.f32 %v424, %v428
    %v567 = vrot.slane %v566, 4
    %v568 = vadd.f32 %v566, %v567
    %v569 = vrot.slane %v568, 2
    %v570 = vadd.f32 %v568, %v569
    %v571 = vrot.slane %v570, 1
    %v572 = vadd.f32 %v570, %v571
    %v573 = vadd.f32 %v429, %v433
    %v574 = vrot.slane %v573, 4
    %v575 = vadd.f32 %v573, %v574
    %v576 = vrot.slane %v575, 2
    %v577 = vadd.f32 %v575, %v576
    %v578 = vrot.slane %v577, 1
    %v579 = vadd.f32 %v577, %v578
    %v580 = vadd.f32 %v430, %v434
    %v581 = vrot.slane %v580, 4
    %v582 = vadd.f32 %v580, %v581
    %v583 = vrot.slane %v582, 2
    %v584 = vadd.f32 %v582, %v583
    %v585 = vrot.slane %v584, 1
    %v586 = vadd.f32 %v584, %v585
    %v587 = vadd.f32 %v431, %v435
    %v588 = vrot.slane %v587, 4
    %v589 = vadd.f32 %v587, %v588
    %v590 = vrot.slane %v589, 2
    %v591 = vadd.f32 %v589, %v590
    %v592 = vrot.slane %v591, 1
    %v593 = vadd.f32 %v591, %v592
    %v594 = vadd.f32 %v432, %v436
    %v595 = vrot.slane %v594, 4
    %v596 = vadd.f32 %v594, %v595
    %v597 = vrot.slane %v596, 2
    %v598 = vadd.f32 %v596, %v597
    %v599 = vrot.slane %v598, 1
    %v600 = vadd.f32 %v598, %v599
    %v601 = vadd.f32 %v437, %v441
    %v602 = vrot.slane %v601, 4
    %v603 = vadd.f32 %v601, %v602
    %v604 = vrot.slane %v603, 2
    %v605 = vadd.f32 %v603, %v604
    %v606 = vrot.slane %v605, 1
    %v607 = vadd.f32 %v605, %v606
    %v608 = vadd.f32 %v438, %v442
    %v609 = vrot.slane %v608, 4
    %v610 = vadd.f32 %v608, %v609
    %v611 = vrot.slane %v610, 2
    %v612 = vadd.f32 %v610, %v611
    %v613 = vrot.slane %v612, 1
    %v614 = vadd.f32 %v612, %v613
    %v615 = vadd.f32 %v439, %v443
    %v616 = vrot.slane %v615, 4
    %v617 = vadd.f32 %v615, %v616
    %v618 = vrot.slane %v617, 2
    %v619 = vadd.f32 %v617, %v618
    %v620 = vrot.slane %v619, 1
    %v621 = vadd.f32 %v619, %v620
    %v622 = vadd.f32 %v440, %v444
    %v623 = vrot.slane %v622, 4
    %v624 = vadd.f32 %v622, %v623
    %v625 = vrot.slane %v624, 2
    %v626 = vadd.f32 %v624, %v625
    %v627 = vrot.slane %v626, 1
    %v628 = vadd.f32 %v626, %v627
    %v629 = vadd.f32 %v445, %v449
    %v630 = vrot.slane %v629, 4
    %v631 = vadd.f32 %v629, %v630
    %v632 = vrot.slane %v631, 2
    %v633 = vadd.f32 %v631, %v632
    %v634 = vrot.slane %v633, 1
    %v635 = vadd.f32 %v633, %v634
    %v636 = vadd.f32 %v446, %v450
    %v637 = vrot.slane %v636, 4
    %v638 = vadd.f32 %v636, %v637
    %v639 = vrot.slane %v638, 2
    %v640 = vadd.f32 %v638, %v639
    %v641 = vrot.slane %v640, 1
    %v642 = vadd.f32 %v640, %v641
    %v643 = vadd.f32 %v447, %v451
    %v644 = vrot.slane %v643, 4
    %v645 = vadd.f32 %v643, %v644
    %v646 = vrot.slane %v645, 2
    %v647 = vadd.f32 %v645, %v646
    %v648 = vrot.slane %v647, 1
    %v649 = vadd.f32 %v647, %v648
    %v650 = vadd.f32 %v448, %v452
    %v651 = vrot.slane %v650, 4
    %v652 = vadd.f32 %v650, %v651
    %v653 = vrot.slane %v652, 2
    %v654 = vadd.f32 %v652, %v653
    %v655 = vrot.slane %v654, 1
    %v656 = vadd.f32 %v654, %v655
    %v657 = vadd.f32 %v453, %v457
    %v658 = vrot.slane %v657, 4
    %v659 = vadd.f32 %v657, %v658
    %v660 = vrot.slane %v659, 2
    %v661 = vadd.f32 %v659, %v660
    %v662 = vrot.slane %v661, 1
    %v663 = vadd.f32 %v661, %v662
    %v664 = vadd.f32 %v454, %v458
    %v665 = vrot.slane %v664, 4
    %v666 = vadd.f32 %v664, %v665
    %v667 = vrot.slane %v666, 2
    %v668 = vadd.f32 %v666, %v667
    %v669 = vrot.slane %v668, 1
    %v670 = vadd.f32 %v668, %v669
    %v671 = vadd.f32 %v455, %v459
    %v672 = vrot.slane %v671, 4
    %v673 = vadd.f32 %v671, %v672
    %v674 = vrot.slane %v673, 2
    %v675 = vadd.f32 %v673, %v674
    %v676 = vrot.slane %v675, 1
    %v677 = vadd.f32 %v675, %v676
    %v678 = vadd.f32 %v456, %v460
    %v679 = vrot.slane %v678, 4
    %v680 = vadd.f32 %v678, %v679
    %v681 = vrot.slane %v680, 2
    %v682 = vadd.f32 %v680, %v681
    %v683 = vrot.slane %v682, 1
    %v684 = vadd.f32 %v682, %v683
    %v685 = vmul.f32 %v467, %v467
    %v686 = vmul.f32 %v474, %v474
    %v687 = vmul.f32 %v481, %v481
    %v688 = vmul.f32 %v488, %v488
    %v689 = vmul.f32 %v495, %v495
    %v690 = vmul.f32 %v502, %v502
    %v691 = vmul.f32 %v509, %v509
    %v692 = vmul.f32 %v516, %v516
    %v693 = vmul.f32 %v523, %v523
    %v694 = vmul.f32 %v530, %v530
    %v695 = vmul.f32 %v537, %v537
    %v696 = vmul.f32 %v544, %v544
    %v697 = vmul.f32 %v551, %v551
    %v698 = vmul.f32 %v558, %v558
    %v699 = vmul.f32 %v565, %v565
    %v700 = vmul.f32 %v572, %v572
    %v701 = vmul.f32 %v579, %v579
    %v702 = vmul.f32 %v586, %v586
    %v703 = vmul.f32 %v593, %v593
    %v704 = vmul.f32 %v600, %v600
    %v705 = vmul.f32 %v607, %v607
    %v706 = vmul.f32 %v614, %v614
    %v707 = vmul.f32 %v621, %v621
    %v708 = vmul.f32 %v628, %v628
    %v709 = vmul.f32 %v635, %v635
    %v710 = vmul.f32 %v642, %v642
    %v711 = vmul.f32 %v649, %v649
    %v712 = vmul.f32 %v656, %v656
    %v713 = vmul.f32 %v663, %v663
    %v714 = vmul.f32 %v670, %v670
    %v715 = vmul.f32 %v677, %v677
    %v716 = vmul.f32 %v684, %v684
    %vm749 = vcmask 1041409
    %v750 = vsel %vm749, %v689, %v685
    %vm751 = vcmask 1042434
    %v752 = vsel %vm751, %v693, %v750
    %vm753 = vcmask 1043459
    %v754 = vsel %vm753, %v697, %v752
    %vm755 = vcmask 1044484
    %v756 = vsel %vm755, %v701, %v754
    %vm757 = vcmask 1045509
    %v758 = vsel %vm757, %v705, %v756
    %vm759 = vcmask 1046534
    %v760 = vsel %vm759, %v709, %v758
    %vm761 = vcmask 1047559
    %v762 = vsel %vm761, %v713, %v760
    %v763 = vsel %vm749, %v690, %v686
    %v764 = vsel %vm751, %v694, %v763
    %v765 = vsel %vm753, %v698, %v764
    %v766 = vsel %vm755, %v702, %v765
    %v767 = vsel %vm757, %v706, %v766
    %v768 = vsel %vm759, %v710, %v767
    %v769 = vsel %vm761, %v714, %v768
    %v770 = vsel %vm749, %v691, %v687
    %v771 = vsel %vm751, %v695, %v770
    %v772 = vsel %vm753, %v699, %v771
    %v773 = vsel %vm755, %v703, %v772
    %v774 = vsel %vm757, %v707, %v773
    %v775 = vsel %vm759, %v711, %v774
    %v776 = vsel %vm761, %v715, %v775
    %v777 = vsel %vm749, %v692, %v688
    %v778 = vsel %vm751, %v696, %v777
    %v779 = vsel %vm753, %v700, %v778
    %v780 = vsel %vm755, %v704, %v779
    %v781 = vsel %vm757, %v708, %v780
    %v782 = vsel %vm759, %v712, %v781
    %v783 = vsel %vm761, %v716, %v782
    %v820 = vsel %vm749, %v495, %v467
    %v821 = vsel %vm751, %v523, %v820
    %v822 = vsel %vm753, %v551, %v821
    %v823 = vsel %vm755, %v579, %v822
    %v824 = vsel %vm757, %v607, %v823
    %v825 = vsel %vm759, %v635, %v824
    %v826 = vsel %vm761, %v663, %v825
    %v827 = vsel %vm749, %v502, %v474
    %v828 = vsel %vm751, %v530, %v827
    %v829 = vsel %vm753, %v558, %v828
    %v830 = vsel %vm755, %v586, %v829
    %v831 = vsel %vm757, %v614, %v830
    %v832 = vsel %vm759, %v642, %v831
    %v833 = vsel %vm761, %v670, %v832
    %v834 = vsel %vm749, %v509, %v481
    %v835 = vsel %vm751, %v537, %v834
    %v836 = vsel %vm753, %v565, %v835
    %v837 = vsel %vm755, %v593, %v836
    %v838 = vsel %vm757, %v621, %v837
    %v839 = vsel %vm759, %v649, %v838
    %v840 = vsel %vm761, %v677, %v839
    %v841 = vsel %vm749, %v516, %v488
    %v842 = vsel %vm751, %v544, %v841
    %v843 = vsel %vm753, %v572, %v842
    %v844 = vsel %vm755, %v600, %v843
    %v845 = vsel %vm757, %v628, %v844
    %v846 = vsel %vm759, %v656, %v845
    %v847 = vsel %vm761, %v684, %v846
    %v852 = vld [vmem:[#allocation2] sm:$0xff]
    %v853 = vld [vmem:[#allocation2 + $0x8] sm:$0xff]
    %v854 = vld [vmem:[#allocation2 + $0x10] sm:$0xff]
    %v855 = vld [vmem:[#allocation2 + $0x18] sm:$0xff]
    %v856 = vld [vmem:[#allocation2 + $0x20] sm:$0xff]
    %v857 = vld [vmem:[#allocation2 + $0x28] sm:$0xff]
    %v858 = vld [vmem:[#allocation2 + $0x30] sm:$0xff]
    %v859 = vld [vmem:[#allocation2 + $0x38] sm:$0xff]
    %v860 = vld [vmem:[#allocation2 + $0x40] sm:$0xff]
    %v861 = vld [vmem:[#allocation2 + $0x48] sm:$0xff]
    %v862 = vld [vmem:[#allocation2 + $0x50] sm:$0xff]
    %v863 = vld [vmem:[#allocation2 + $0x58] sm:$0xff]
    %v864 = vld [vmem:[#allocation2 + $0x60] sm:$0xff]
    %v865 = vld [vmem:[#allocation2 + $0x68] sm:$0xff]
    %v866 = vld [vmem:[#allocation2 + $0x70] sm:$0xff]
    %v867 = vld [vmem:[#allocation2 + $0x78] sm:$0xff]
    %v868 = vld [vmem:[#allocation2 + $0x80] sm:$0xff]
    %v869 = vld [vmem:[#allocation2 + $0x88] sm:$0xff]
    %v870 = vld [vmem:[#allocation2 + $0x90] sm:$0xff]
    %v871 = vld [vmem:[#allocation2 + $0x98] sm:$0xff]
    %v872 = vld [vmem:[#allocation2 + $0xa0] sm:$0xff]
    %v873 = vld [vmem:[#allocation2 + $0xa8] sm:$0xff]
    %v874 = vld [vmem:[#allocation2 + $0xb0] sm:$0xff]
    %v875 = vld [vmem:[#allocation2 + $0xb8] sm:$0xff]
    %v876 = vld [vmem:[#allocation2 + $0xc0] sm:$0xff]
    %v877 = vld [vmem:[#allocation2 + $0xc8] sm:$0xff]
    %v878 = vld [vmem:[#allocation2 + $0xd0] sm:$0xff]
    %v879 = vld [vmem:[#allocation2 + $0xd8] sm:$0xff]
    %v880 = vld [vmem:[#allocation2 + $0xe0] sm:$0xff]
    %v881 = vld [vmem:[#allocation2 + $0xe8] sm:$0xff]
    %v882 = vld [vmem:[#allocation2 + $0xf0] sm:$0xff]
    %v883 = vld [vmem:[#allocation2 + $0xf8] sm:$0xff]
    %v884 = vld [vmem:[#allocation2 + $0x100] sm:$0xff]
    %v885 = vld [vmem:[#allocation2 + $0x108] sm:$0xff]
    %v886 = vld [vmem:[#allocation2 + $0x110] sm:$0xff]
    %v887 = vld [vmem:[#allocation2 + $0x118] sm:$0xff]
    %v888 = vld [vmem:[#allocation2 + $0x120] sm:$0xff]
    %v889 = vld [vmem:[#allocation2 + $0x128] sm:$0xff]
    %v890 = vld [vmem:[#allocation2 + $0x130] sm:$0xff]
    %v891 = vld [vmem:[#allocation2 + $0x138] sm:$0xff]
    %v892 = vld [vmem:[#allocation2 + $0x140] sm:$0xff]
    %v893 = vld [vmem:[#allocation2 + $0x148] sm:$0xff]
    %v894 = vld [vmem:[#allocation2 + $0x150] sm:$0xff]
    %v895 = vld [vmem:[#allocation2 + $0x158] sm:$0xff]
    %v896 = vld [vmem:[#allocation2 + $0x160] sm:$0xff]
    %v897 = vld [vmem:[#allocation2 + $0x168] sm:$0xff]
    %v898 = vld [vmem:[#allocation2 + $0x170] sm:$0xff]
    %v899 = vld [vmem:[#allocation2 + $0x178] sm:$0xff]
    %v900 = vld [vmem:[#allocation2 + $0x180] sm:$0xff]
    %v901 = vld [vmem:[#allocation2 + $0x188] sm:$0xff]
    %v902 = vld [vmem:[#allocation2 + $0x190] sm:$0xff]
    %v903 = vld [vmem:[#allocation2 + $0x198] sm:$0xff]
    %v904 = vld [vmem:[#allocation2 + $0x1a0] sm:$0xff]
    %v905 = vld [vmem:[#allocation2 + $0x1a8] sm:$0xff]
    %v906 = vld [vmem:[#allocation2 + $0x1b0] sm:$0xff]
    %v907 = vld [vmem:[#allocation2 + $0x1b8] sm:$0xff]
    %v908 = vld [vmem:[#allocation2 + $0x1c0] sm:$0xff]
    %v909 = vld [vmem:[#allocation2 + $0x1c8] sm:$0xff]
    %v910 = vld [vmem:[#allocation2 + $0x1d0] sm:$0xff]
    %v911 = vld [vmem:[#allocation2 + $0x1d8] sm:$0xff]
    %v912 = vld [vmem:[#allocation2 + $0x1e0] sm:$0xff]
    %v913 = vld [vmem:[#allocation2 + $0x1e8] sm:$0xff]
    %v914 = vld [vmem:[#allocation2 + $0x1f0] sm:$0xff]
    %v915 = vld [vmem:[#allocation2 + $0x1f8] sm:$0xff]
    %v916 = vld [vmem:[#allocation2 + $0x200] sm:$0xff]
    %v917 = vld [vmem:[#allocation2 + $0x208] sm:$0xff]
    %v918 = vld [vmem:[#allocation2 + $0x210] sm:$0xff]
    %v919 = vld [vmem:[#allocation2 + $0x218] sm:$0xff]
    %v920 = vld [vmem:[#allocation2 + $0x220] sm:$0xff]
    %v921 = vld [vmem:[#allocation2 + $0x228] sm:$0xff]
    %v922 = vld [vmem:[#allocation2 + $0x230] sm:$0xff]
    %v923 = vld [vmem:[#allocation2 + $0x238] sm:$0xff]
    %v924 = vld [vmem:[#allocation2 + $0x240] sm:$0xff]
    %v925 = vld [vmem:[#allocation2 + $0x248] sm:$0xff]
    %v926 = vld [vmem:[#allocation2 + $0x250] sm:$0xff]
    %v927 = vld [vmem:[#allocation2 + $0x258] sm:$0xff]
    %v928 = vld [vmem:[#allocation2 + $0x260] sm:$0xff]
    %v929 = vld [vmem:[#allocation2 + $0x268] sm:$0xff]
    %v930 = vld [vmem:[#allocation2 + $0x270] sm:$0xff]
    %v931 = vld [vmem:[#allocation2 + $0x278] sm:$0xff]
    %v932 = vld [vmem:[#allocation2 + $0x280] sm:$0xff]
    %v933 = vld [vmem:[#allocation2 + $0x288] sm:$0xff]
    %v934 = vld [vmem:[#allocation2 + $0x290] sm:$0xff]
    %v935 = vld [vmem:[#allocation2 + $0x298] sm:$0xff]
    %v936 = vld [vmem:[#allocation2 + $0x2a0] sm:$0xff]
    %v937 = vld [vmem:[#allocation2 + $0x2a8] sm:$0xff]
    %v938 = vld [vmem:[#allocation2 + $0x2b0] sm:$0xff]
    %v939 = vld [vmem:[#allocation2 + $0x2b8] sm:$0xff]
    %v940 = vld [vmem:[#allocation2 + $0x2c0] sm:$0xff]
    %v941 = vld [vmem:[#allocation2 + $0x2c8] sm:$0xff]
    %v942 = vld [vmem:[#allocation2 + $0x2d0] sm:$0xff]
    %v943 = vld [vmem:[#allocation2 + $0x2d8] sm:$0xff]
    %v944 = vld [vmem:[#allocation2 + $0x2e0] sm:$0xff]
    %v945 = vld [vmem:[#allocation2 + $0x2e8] sm:$0xff]
    %v946 = vld [vmem:[#allocation2 + $0x2f0] sm:$0xff]
    %v947 = vld [vmem:[#allocation2 + $0x2f8] sm:$0xff]
    %v948 = vld [vmem:[#allocation2 + $0x300] sm:$0xff]
    %v949 = vld [vmem:[#allocation2 + $0x308] sm:$0xff]
    %v950 = vld [vmem:[#allocation2 + $0x310] sm:$0xff]
    %v951 = vld [vmem:[#allocation2 + $0x318] sm:$0xff]
    %v952 = vld [vmem:[#allocation2 + $0x320] sm:$0xff]
    %v953 = vld [vmem:[#allocation2 + $0x328] sm:$0xff]
    %v954 = vld [vmem:[#allocation2 + $0x330] sm:$0xff]
    %v955 = vld [vmem:[#allocation2 + $0x338] sm:$0xff]
    %v956 = vld [vmem:[#allocation2 + $0x340] sm:$0xff]
    %v957 = vld [vmem:[#allocation2 + $0x348] sm:$0xff]
    %v958 = vld [vmem:[#allocation2 + $0x350] sm:$0xff]
    %v959 = vld [vmem:[#allocation2 + $0x358] sm:$0xff]
    %v960 = vld [vmem:[#allocation2 + $0x360] sm:$0xff]
    %v961 = vld [vmem:[#allocation2 + $0x368] sm:$0xff]
    %v962 = vld [vmem:[#allocation2 + $0x370] sm:$0xff]
    %v963 = vld [vmem:[#allocation2 + $0x378] sm:$0xff]
    %v964 = vld [vmem:[#allocation2 + $0x380] sm:$0xff]
    %v965 = vld [vmem:[#allocation2 + $0x388] sm:$0xff]
    %v966 = vld [vmem:[#allocation2 + $0x390] sm:$0xff]
    %v967 = vld [vmem:[#allocation2 + $0x398] sm:$0xff]
    %v968 = vld [vmem:[#allocation2 + $0x3a0] sm:$0xff]
    %v969 = vld [vmem:[#allocation2 + $0x3a8] sm:$0xff]
    %v970 = vld [vmem:[#allocation2 + $0x3b0] sm:$0xff]
    %v971 = vld [vmem:[#allocation2 + $0x3b8] sm:$0xff]
    %v972 = vld [vmem:[#allocation2 + $0x3c0] sm:$0xff]
    %v973 = vld [vmem:[#allocation2 + $0x3c8] sm:$0xff]
    %v974 = vld [vmem:[#allocation2 + $0x3d0] sm:$0xff]
    %v975 = vld [vmem:[#allocation2 + $0x3d8] sm:$0xff]
    %v976 = vld [vmem:[#allocation2 + $0x3e0] sm:$0xff]
    %v977 = vld [vmem:[#allocation2 + $0x3e8] sm:$0xff]
    %v978 = vld [vmem:[#allocation2 + $0x3f0] sm:$0xff]
    %v979 = vld [vmem:[#allocation2 + $0x3f8] sm:$0xff]
    %v980 = vld [vmem:[%s4] sm:$0x1]
    %v982 = vlaneseq
    %v983 = vshrl.u32 %v982, 7
    %v984 = vsub.s32 0, %v983
    %v985 = vrot.slane %v980, %v984
    %987 = vmatprep.subr.mxu0 0.0
    %988 = vmatpush1.msra.mxu0 %v852
    %989 = vmatprep.subr.mxu0 0.0
    %990 = vmatpush1.msra.mxu0 %v853
    %991 = vmatprep.subr.mxu0 0.0
    %992 = vmatpush1.msra.mxu0 %v854
    %993 = vmatprep.subr.mxu0 0.0
    %994 = vmatpush1.msra.mxu0 %v855
    %995 = vmatprep.subr.mxu0 0.0
    %996 = vmatpush1.msra.mxu0 %v856
    %997 = vmatprep.subr.mxu0 0.0
    %998 = vmatpush1.msra.mxu0 %v857
    %999 = vmatprep.subr.mxu0 0.0
    %1000 = vmatpush1.msra.mxu0 %v858
    %1001 = vmatprep.subr.mxu0 0.0
    %1002 = vmatpush1.msra.mxu0 %v859
    %1003 = vmatprep.subr.mxu0 0.0
    %1004 = vmatpush1.msra.mxu0 %v860
    %1005 = vmatprep.subr.mxu0 0.0
    %1006 = vmatpush1.msra.mxu0 %v861
    %1007 = vmatprep.subr.mxu0 0.0
    %1008 = vmatpush1.msra.mxu0 %v862
    %1009 = vmatprep.subr.mxu0 0.0
    %1010 = vmatpush1.msra.mxu0 %v863
    %1011 = vmatprep.subr.mxu0 0.0
    %1012 = vmatpush1.msra.mxu0 %v864
    %1013 = vmatprep.subr.mxu0 0.0
    %1014 = vmatpush1.msra.mxu0 %v865
    %1015 = vmatprep.subr.mxu0 0.0
    %1016 = vmatpush1.msra.mxu0 %v866
    %1017 = vmatprep.subr.mxu0 0.0
    %1018 = vmatpush1.msra.mxu0 %v867
    %1019 = vmatprep.subr.mxu0 0.0
    %1020 = vmatpush1.msra.mxu0 %v868
    %1021 = vmatprep.subr.mxu0 0.0
    %1022 = vmatpush1.msra.mxu0 %v869
    %1023 = vmatprep.subr.mxu0 0.0
    %1024 = vmatpush1.msra.mxu0 %v870
    %1025 = vmatprep.subr.mxu0 0.0
    %1026 = vmatpush1.msra.mxu0 %v871
    %1027 = vmatprep.subr.mxu0 0.0
    %1028 = vmatpush1.msra.mxu0 %v872
    %1029 = vmatprep.subr.mxu0 0.0
    %1030 = vmatpush1.msra.mxu0 %v873
    %1031 = vmatprep.subr.mxu0 0.0
    %1032 = vmatpush1.msra.mxu0 %v874
    %1033 = vmatprep.subr.mxu0 0.0
    %1034 = vmatpush1.msra.mxu0 %v875
    %1035 = vmatprep.subr.mxu0 0.0
    %1036 = vmatpush1.msra.mxu0 %v876
    %1037 = vmatprep.subr.mxu0 0.0
    %1038 = vmatpush1.msra.mxu0 %v877
    %1039 = vmatprep.subr.mxu0 0.0
    %1040 = vmatpush1.msra.mxu0 %v878
    %1041 = vmatprep.subr.mxu0 0.0
    %1042 = vmatpush1.msra.mxu0 %v879
    %1043 = vmatprep.subr.mxu0 0.0
    %1044 = vmatpush1.msra.mxu0 %v880
    %1045 = vmatprep.subr.mxu0 0.0
    %1046 = vmatpush1.msra.mxu0 %v881
    %1047 = vmatprep.subr.mxu0 0.0
    %1048 = vmatpush1.msra.mxu0 %v882
    %1049 = vmatprep.subr.mxu0 0.0
    %1050 = vmatpush1.msra.mxu0 %v883
    %1051 = vmatprep.mubr.f32.mxu0 %v769
    %1052 = vmatmul.mubr.f32.gmra.mrb[0].mxu0 %v762
    %v1053 = vpop.f32.mrb[0].mxu0
    %v1054 = vadd.f32 %v985, %v1053
    %v1055 = vpop.f32.mrb[0].mxu0
    %1056 = vdwg.mxu0
    %1057 = vmatprep.subr.mxu0 0.0
    %1058 = vmatpush1.msra.mxu0 %v884
    %1059 = vmatprep.subr.mxu0 0.0
    %1060 = vmatpush1.msra.mxu0 %v885
    %1061 = vmatprep.subr.mxu0 0.0
    %1062 = vmatpush1.msra.mxu0 %v886
    %1063 = vmatprep.subr.mxu0 0.0
    %1064 = vmatpush1.msra.mxu0 %v887
    %1065 = vmatprep.subr.mxu0 0.0
    %1066 = vmatpush1.msra.mxu0 %v888
    %1067 = vmatprep.subr.mxu0 0.0
    %1068 = vmatpush1.msra.mxu0 %v889
    %1069 = vmatprep.subr.mxu0 0.0
    %1070 = vmatpush1.msra.mxu0 %v890
    %1071 = vmatprep.subr.mxu0 0.0
    %1072 = vmatpush1.msra.mxu0 %v891
    %1073 = vmatprep.subr.mxu0 0.0
    %1074 = vmatpush1.msra.mxu0 %v892
    %1075 = vmatprep.subr.mxu0 0.0
    %1076 = vmatpush1.msra.mxu0 %v893
    %1077 = vmatprep.subr.mxu0 0.0
    %1078 = vmatpush1.msra.mxu0 %v894
    %1079 = vmatprep.subr.mxu0 0.0
    %1080 = vmatpush1.msra.mxu0 %v895
    %1081 = vmatprep.subr.mxu0 0.0
    %1082 = vmatpush1.msra.mxu0 %v896
    %1083 = vmatprep.subr.mxu0 0.0
    %1084 = vmatpush1.msra.mxu0 %v897
    %1085 = vmatprep.subr.mxu0 0.0
    %1086 = vmatpush1.msra.mxu0 %v898
    %1087 = vmatprep.subr.mxu0 0.0
    %1088 = vmatpush1.msra.mxu0 %v899
    %1089 = vmatprep.subr.mxu0 0.0
    %1090 = vmatpush1.msra.mxu0 %v900
    %1091 = vmatprep.subr.mxu0 0.0
    %1092 = vmatpush1.msra.mxu0 %v901
    %1093 = vmatprep.subr.mxu0 0.0
    %1094 = vmatpush1.msra.mxu0 %v902
    %1095 = vmatprep.subr.mxu0 0.0
    %1096 = vmatpush1.msra.mxu0 %v903
    %1097 = vmatprep.subr.mxu0 0.0
    %1098 = vmatpush1.msra.mxu0 %v904
    %1099 = vmatprep.subr.mxu0 0.0
    %1100 = vmatpush1.msra.mxu0 %v905
    %1101 = vmatprep.subr.mxu0 0.0
    %1102 = vmatpush1.msra.mxu0 %v906
    %1103 = vmatprep.subr.mxu0 0.0
    %1104 = vmatpush1.msra.mxu0 %v907
    %1105 = vmatprep.subr.mxu0 0.0
    %1106 = vmatpush1.msra.mxu0 %v908
    %1107 = vmatprep.subr.mxu0 0.0
    %1108 = vmatpush1.msra.mxu0 %v909
    %1109 = vmatprep.subr.mxu0 0.0
    %1110 = vmatpush1.msra.mxu0 %v910
    %1111 = vmatprep.subr.mxu0 0.0
    %1112 = vmatpush1.msra.mxu0 %v911
    %1113 = vmatprep.subr.mxu0 0.0
    %1114 = vmatpush1.msra.mxu0 %v912
    %1115 = vmatprep.subr.mxu0 0.0
    %1116 = vmatpush1.msra.mxu0 %v913
    %1117 = vmatprep.subr.mxu0 0.0
    %1118 = vmatpush1.msra.mxu0 %v914
    %1119 = vmatprep.subr.mxu0 0.0
    %1120 = vmatpush1.msra.mxu0 %v915
    %1121 = vmatprep.mubr.f32.mxu0 %v783
    %1122 = vmatmul.mubr.f32.gmra.mrb[0].mxu0 %v776
    %v1123 = vpop.f32.mrb[0].mxu0
    %v1124 = vadd.f32 %v1054, %v1123
    %v1125 = vpop.f32.mrb[0].mxu0
    %1126 = vdwg.mxu0
    %1127 = vmatprep.subr.mxu0 0.0
    %1128 = vmatpush1.msra.mxu0 %v916
    %1129 = vmatprep.subr.mxu0 0.0
    %1130 = vmatpush1.msra.mxu0 %v917
    %1131 = vmatprep.subr.mxu0 0.0
    %1132 = vmatpush1.msra.mxu0 %v918
    %1133 = vmatprep.subr.mxu0 0.0
    %1134 = vmatpush1.msra.mxu0 %v919
    %1135 = vmatprep.subr.mxu0 0.0
    %1136 = vmatpush1.msra.mxu0 %v920
    %1137 = vmatprep.subr.mxu0 0.0
    %1138 = vmatpush1.msra.mxu0 %v921
    %1139 = vmatprep.subr.mxu0 0.0
    %1140 = vmatpush1.msra.mxu0 %v922
    %1141 = vmatprep.subr.mxu0 0.0
    %1142 = vmatpush1.msra.mxu0 %v923
    %1143 = vmatprep.subr.mxu0 0.0
    %1144 = vmatpush1.msra.mxu0 %v924
    %1145 = vmatprep.subr.mxu0 0.0
    %1146 = vmatpush1.msra.mxu0 %v925
    %1147 = vmatprep.subr.mxu0 0.0
    %1148 = vmatpush1.msra.mxu0 %v926
    %1149 = vmatprep.subr.mxu0 0.0
    %1150 = vmatpush1.msra.mxu0 %v927
    %1151 = vmatprep.subr.mxu0 0.0
    %1152 = vmatpush1.msra.mxu0 %v928
    %1153 = vmatprep.subr.mxu0 0.0
    %1154 = vmatpush1.msra.mxu0 %v929
    %1155 = vmatprep.subr.mxu0 0.0
    %1156 = vmatpush1.msra.mxu0 %v930
    %1157 = vmatprep.subr.mxu0 0.0
    %1158 = vmatpush1.msra.mxu0 %v931
    %1159 = vmatprep.subr.mxu0 0.0
    %1160 = vmatpush1.msra.mxu0 %v932
    %1161 = vmatprep.subr.mxu0 0.0
    %1162 = vmatpush1.msra.mxu0 %v933
    %1163 = vmatprep.subr.mxu0 0.0
    %1164 = vmatpush1.msra.mxu0 %v934
    %1165 = vmatprep.subr.mxu0 0.0
    %1166 = vmatpush1.msra.mxu0 %v935
    %1167 = vmatprep.subr.mxu0 0.0
    %1168 = vmatpush1.msra.mxu0 %v936
    %1169 = vmatprep.subr.mxu0 0.0
    %1170 = vmatpush1.msra.mxu0 %v937
    %1171 = vmatprep.subr.mxu0 0.0
    %1172 = vmatpush1.msra.mxu0 %v938
    %1173 = vmatprep.subr.mxu0 0.0
    %1174 = vmatpush1.msra.mxu0 %v939
    %1175 = vmatprep.subr.mxu0 0.0
    %1176 = vmatpush1.msra.mxu0 %v940
    %1177 = vmatprep.subr.mxu0 0.0
    %1178 = vmatpush1.msra.mxu0 %v941
    %1179 = vmatprep.subr.mxu0 0.0
    %1180 = vmatpush1.msra.mxu0 %v942
    %1181 = vmatprep.subr.mxu0 0.0
    %1182 = vmatpush1.msra.mxu0 %v943
    %1183 = vmatprep.subr.mxu0 0.0
    %1184 = vmatpush1.msra.mxu0 %v944
    %1185 = vmatprep.subr.mxu0 0.0
    %1186 = vmatpush1.msra.mxu0 %v945
    %1187 = vmatprep.subr.mxu0 0.0
    %1188 = vmatpush1.msra.mxu0 %v946
    %1189 = vmatprep.subr.mxu0 0.0
    %1190 = vmatpush1.msra.mxu0 %v947
    %1191 = vmatprep.mubr.f32.mxu0 %v833
    %1192 = vmatmul.mubr.f32.gmra.mrb[0].mxu0 %v826
    %v1193 = vpop.f32.mrb[0].mxu0
    %v1194 = vadd.f32 %v1124, %v1193
    %v1195 = vpop.f32.mrb[0].mxu0
    %1196 = vdwg.mxu0
    %1197 = vmatprep.subr.mxu0 0.0
    %1198 = vmatpush1.msra.mxu0 %v948
    %1199 = vmatprep.subr.mxu0 0.0
    %1200 = vmatpush1.msra.mxu0 %v949
    %1201 = vmatprep.subr.mxu0 0.0
    %1202 = vmatpush1.msra.mxu0 %v950
    %1203 = vmatprep.subr.mxu0 0.0
    %1204 = vmatpush1.msra.mxu0 %v951
    %1205 = vmatprep.subr.mxu0 0.0
    %1206 = vmatpush1.msra.mxu0 %v952
    %1207 = vmatprep.subr.mxu0 0.0
    %1208 = vmatpush1.msra.mxu0 %v953
    %1209 = vmatprep.subr.mxu0 0.0
    %1210 = vmatpush1.msra.mxu0 %v954
    %1211 = vmatprep.subr.mxu0 0.0
    %1212 = vmatpush1.msra.mxu0 %v955
    %1213 = vmatprep.subr.mxu0 0.0
    %1214 = vmatpush1.msra.mxu0 %v956
    %1215 = vmatprep.subr.mxu0 0.0
    %1216 = vmatpush1.msra.mxu0 %v957
    %1217 = vmatprep.subr.mxu0 0.0
    %1218 = vmatpush1.msra.mxu0 %v958
    %1219 = vmatprep.subr.mxu0 0.0
    %1220 = vmatpush1.msra.mxu0 %v959
    %1221 = vmatprep.subr.mxu0 0.0
    %1222 = vmatpush1.msra.mxu0 %v960
    %1223 = vmatprep.subr.mxu0 0.0
    %1224 = vmatpush1.msra.mxu0 %v961
    %1225 = vmatprep.subr.mxu0 0.0
    %1226 = vmatpush1.msra.mxu0 %v962
    %1227 = vmatprep.subr.mxu0 0.0
    %1228 = vmatpush1.msra.mxu0 %v963
    %1229 = vmatprep.subr.mxu0 0.0
    %1230 = vmatpush1.msra.mxu0 %v964
    %1231 = vmatprep.subr.mxu0 0.0
    %1232 = vmatpush1.msra.mxu0 %v965
    %1233 = vmatprep.subr.mxu0 0.0
    %1234 = vmatpush1.msra.mxu0 %v966
    %1235 = vmatprep.subr.mxu0 0.0
    %1236 = vmatpush1.msra.mxu0 %v967
    %1237 = vmatprep.subr.mxu0 0.0
    %1238 = vmatpush1.msra.mxu0 %v968
    %1239 = vmatprep.subr.mxu0 0.0
    %1240 = vmatpush1.msra.mxu0 %v969
    %1241 = vmatprep.subr.mxu0 0.0
    %1242 = vmatpush1.msra.mxu0 %v970
    %1243 = vmatprep.subr.mxu0 0.0
    %1244 = vmatpush1.msra.mxu0 %v971
    %1245 = vmatprep.subr.mxu0 0.0
    %1246 = vmatpush1.msra.mxu0 %v972
    %1247 = vmatprep.subr.mxu0 0.0
    %1248 = vmatpush1.msra.mxu0 %v973
    %1249 = vmatprep.subr.mxu0 0.0
    %1250 = vmatpush1.msra.mxu0 %v974
    %1251 = vmatprep.subr.mxu0 0.0
    %1252 = vmatpush1.msra.mxu0 %v975
    %1253 = vmatprep.subr.mxu0 0.0
    %1254 = vmatpush1.msra.mxu0 %v976
    %1255 = vmatprep.subr.mxu0 0.0
    %1256 = vmatpush1.msra.mxu0 %v977
    %1257 = vmatprep.subr.mxu0 0.0
    %1258 = vmatpush1.msra.mxu0 %v978
    %1259 = vmatprep.subr.mxu0 0.0
    %1260 = vmatpush1.msra.mxu0 %v979
    %1261 = vmatprep.mubr.f32.mxu0 %v847
    %1262 = vmatmul.mubr.f32.gmra.mrb[0].mxu0 %v840
    %v1263 = vpop.f32.mrb[0].mxu0
    %v1264 = vadd.f32 %v1194, %v1263
    %v1265 = vpop.f32.mrb[0].mxu0
    %1266 = vdwg.mxu0
    %1267 = vst [vmem:[#allocation5] sm:$0xff] %v1264
    // Predicated region
    $region26: #{tpu_custom_call.1} parent=1 // pred_check
      _
    $region27: #{tpu_custom_call.1} parent=1 // pred_check_branch
      %1269 = sbr.rel (0) target = $region29
    $region28: #{tpu_custom_call.1} parent=1 // pred_region
      %s1271 = ssub.s32 128, 128
      %1272 = vsyncadd [#allocation4], %s1271
      %s1274 = sshll.u32 [#allocation5], 4
      %s1275 = int_to_ptr.vmem [resolvable:$true] %s1274
      %1277 = dma.vmem_to_hbm [thread:$0]  %s1275, 128, %s5, [#allocation4]
    $region29: #{tpu_custom_call.1} parent=1 // pred_fallthru
      _
    // Predicated region
    $region30: #{tpu_custom_call.1} parent=1 // pred_check
      _
    $region31: #{tpu_custom_call.1} parent=1 // pred_check_branch
      %1279 = sbr.rel (0) target = $region33
    $region32: #{tpu_custom_call.1} parent=1 // pred_region
      %1280 = dma.done [#allocation4], 128
    $region33: #{tpu_custom_call.1} parent=1 // pred_fallthru
      _
    %1281 = vsyncpa [#allocation3], 1
    %1282 = vsyncpa [#allocation4], 1

</llo_original>
